<compile_context>
chip_gen: v7x
topology: tpu7x:2x2x1
jax: 0.10.0
libtpu: 0.0.40
codegen_flags: <defaults>
</compile_context>

<pallas_src>
import jax
import jax.numpy as jnp
from jax.experimental import pallas as pl
from jax.experimental.pallas import tpu as pltpu


def _round_up(n, m):
    return -(-n // m) * m


def _cyclefc_kernel(x_ref, wt_ref, b_ref, o_ref):
    """One (batch, c_out-tile, hw-tile) grid step.

    x_ref : (1, Kp, thw)  pre-shifted, channel-permuted, lane-dense input slab
    wt_ref: (ct, Kp)      W^T tile (rows permuted to match, K zero-padded once)
    b_ref : (ct, 1)       f32 bias column
    o_ref : (1, ct, thw)  lane-dense output tile
    """
    acc = jnp.dot(wt_ref[...], x_ref[0], preferred_element_type=jnp.float32)
    o_ref[0] = (acc + b_ref[...]).astype(o_ref.dtype)


def cycle_fc(x, w_mlp, bias, sh, sw, *, block_cout=None, block_hw=None,
             compute_dtype=jnp.bfloat16, out_dtype=None):
    """x: (b, c_in, h, w) NCHW; w_mlp: (c_in, c_out); bias: (c_out,)."""
    b, c_in, h, w = x.shape
    c_out = w_mlp.shape[1]
    hw = h * w
    if out_dtype is None:
        out_dtype = x.dtype

    # ---- Wrapper-side layout plumbing ------------------------------------
    # Channels sharing a residue r = c % (sh*sw) share the same (di, dj) shift;
    # roll each group slab (static shifts) and concatenate group-major.  The
    # weight rows are permuted identically, so the kernel is a plain matmul.
    n_groups = sh * sw
    xs_parts, w_parts = [], []
    for r in range(min(n_groups, c_in)):
        di = r % sh - 1
        dj = (r // sh) % sw - 1
        xs_parts.append(jnp.roll(x[:, r::n_groups], shift=(-di, -dj), axis=(2, 3)))
        w_parts.append(w_mlp[r::n_groups])
    x_shift = jnp.concatenate(xs_parts, axis=1) if len(xs_parts) > 1 else xs_parts[0]
    w_perm = jnp.concatenate(w_parts, axis=0) if len(w_parts) > 1 else w_parts[0]

    # Pad K once to the dtype sublane pack (no per-group padding).
    sub = 16 if jnp.dtype(compute_dtype).itemsize == 2 else 8
    kp = _round_up(c_in, sub)

    # Lane-dense hw: pad to a multiple of 128; tile when large.
    hw128 = _round_up(hw, 128)
    if block_hw is None:
        block_hw = hw128 if hw128 <= 4096 else 1024
    assert block_hw % 128 == 0
    hwp = _round_up(hw, block_hw)

    xf = x_shift.reshape(b, c_in, hw).astype(compute_dtype)
    xs = jnp.zeros((b, kp, hwp), compute_dtype)
    xs = xs.at[:, :c_in, :hw].set(xf)

    wt = jnp.zeros((c_out, kp), compute_dtype)
    wt = wt.at[:, :c_in].set(w_perm.T.astype(compute_dtype))

    bias_col = bias.astype(jnp.float32).reshape(c_out, 1)

    # c_out tiling keeps tiles MXU/lane friendly and bounds per-step VMEM.
    if block_cout is None:
        if c_out % 256 == 0:
            block_cout = 256
        elif c_out % 128 == 0:
            block_cout = 128
        else:
            block_cout = c_out
    assert c_out % block_cout == 0
    ct = block_cout

    # Right-size the VMEM request from the actual per-step footprint
    # (double-buffered inputs + output), clamped for v7x's 64 MiB per TC.
    itm = jnp.dtype(compute_dtype).itemsize
    oitm = jnp.dtype(out_dtype).itemsize
    per_step = (kp * block_hw * itm      # x slab
                + ct * kp * itm          # W^T tile
                + ct * 4                 # bias column (f32)
                + ct * block_hw * oitm)  # output tile
    vmem_limit = int(min(max(4 * per_step + (2 << 20), 8 << 20), 64 << 20))

    out_flat = pl.pallas_call(
        _cyclefc_kernel,
        out_shape=jax.ShapeDtypeStruct((b, c_out, hwp), out_dtype),
        grid=(b, c_out // ct, hwp // block_hw),
        in_specs=[
            pl.BlockSpec((1, kp, block_hw), lambda k, j, l: (k, 0, l)),
            pl.BlockSpec((ct, kp), lambda k, j, l: (j, 0)),
            pl.BlockSpec((ct, 1), lambda k, j, l: (j, 0)),
        ],
        out_specs=pl.BlockSpec((1, ct, block_hw), lambda k, j, l: (k, j, l)),
        compiler_params=pltpu.CompilerParams(
            dimension_semantics=("parallel", "parallel", "parallel"),
            vmem_limit_bytes=vmem_limit,
        ),
    )(xs, wt, bias_col)

    # Free layout plumbing: drop hw padding, back to NCHW.
    return out_flat[:, :, :hw].reshape(b, c_out, h, w)


def cycle_fc_ref(x, w_mlp, bias, sh, sw):
    """Pure-JAX f32 reference of the PyTorch forward."""
    b, c_in, h, w = x.shape
    shifted = jnp.stack(
        [
            jnp.roll(
                x[:, c],
                shift=(-((c % sh) - 1), -(((c // sh) % sw) - 1)),
                axis=(1, 2),
            )
            for c in range(c_in)
        ],
        axis=1,
    )
    out = jnp.einsum("bchw,co->bohw", shifted, w_mlp)
    return out + bias[None, :, None, None]


def _run_case(key, b, c_in, c_out, h, w, sh, sw, compute_dtype, atol, rtol):
    kx, kw, kb = jax.random.split(key, 3)
    x = jax.random.normal(kx, (b, c_in, h, w), jnp.float32)
    w_mlp = jax.random.normal(kw, (c_in, c_out), jnp.float32)   # torch.randn analog
    bias = jax.random.normal(kb, (c_out,), jnp.float32)         # torch.randn analog

    out = jax.block_until_ready(
        cycle_fc(x, w_mlp, bias, sh, sw, compute_dtype=compute_dtype))

    # Reference sees the same operand quantization as the kernel (f32 bias,
    # exact f32 accumulation of exact bf16xbf16 products on the MXU).
    xq = x.astype(compute_dtype).astype(jnp.float32)
    wq = w_mlp.astype(compute_dtype).astype(jnp.float32)
    ref = cycle_fc_ref(xq, wq, bias, sh, sw)

    assert out.shape == (b, c_out, h, w), out.shape
    err = float(jnp.max(jnp.abs(out - ref)))
    assert jnp.allclose(out, ref, atol=atol, rtol=rtol), err


if __name__ == "__main__":
    key = jax.random.PRNGKey(0)
    k1, k2 = jax.random.split(key)
    # Main case (shapes consistent with the module), f32 compute: exact parity
    # with the f32 PyTorch reference at tight tolerance.
    _run_case(k1, b=2, c_in=4, c_out=8, h=16, w=16, sh=2, sw=2,
              compute_dtype=jnp.float32, atol=1e-4, rtol=1e-4)
    # Uneven channel groups, hw not a multiple of 128 (exercises lane padding),
    # default bf16 operands with f32 accumulation.
    _run_case(k2, b=1, c_in=7, c_out=5, h=14, w=12, sh=2, sw=3,
              compute_dtype=jnp.bfloat16, atol=1e-3, rtol=1e-3)
    print("KERNEL_OK")
</pallas_src>

<mosaic_0001>
module attributes {stable_mosaic.version = 11 : i64} {
  func.func @_cyclefc_kernel(%arg0: i32, %arg1: i32, %arg2: i32, %arg3: memref<1x8x256xf32, #tpu.memory_space<vmem>>, %arg4: memref<8x8xf32, #tpu.memory_space<vmem>>, %arg5: memref<8x1xf32, #tpu.memory_space<vmem>>, %arg6: memref<1x8x256xf32, #tpu.memory_space<vmem>>) attributes {dimension_semantics = [#tpu.dimension_semantics<parallel>, #tpu.dimension_semantics<parallel>, #tpu.dimension_semantics<parallel>], iteration_bounds = array<i64: 2, 1, 1>, scalar_prefetch = 0 : i64, scratch_operands = 0 : i64, tpu.core_type = #tpu.core_type<tc>, window_params = [{transform_indices = @transform_0, window_bounds = array<i64: 1, 8, 256>}, {transform_indices = @transform_1, window_bounds = array<i64: 8, 8>}, {transform_indices = @transform_2, window_bounds = array<i64: 8, 1>}, {transform_indices = @transform_3, window_bounds = array<i64: 1, 8, 256>}]} {
    %c0 = arith.constant 0 : index
    %c0_0 = arith.constant 0 : index
    %0 = vector.load %arg4[%c0, %c0_0] : memref<8x8xf32, #tpu.memory_space<vmem>>, vector<8x8xf32>
    %c0_1 = arith.constant 0 : index
    %c0_2 = arith.constant 0 : index
    %c0_3 = arith.constant 0 : index
    %1 = vector.load %arg3[%c0_1, %c0_2, %c0_3] : memref<1x8x256xf32, #tpu.memory_space<vmem>>, vector<1x8x256xf32>
    %2 = vector.shape_cast %1 : vector<1x8x256xf32> to vector<8x256xf32>
    %cst = arith.constant dense<0.000000e+00> : vector<8x256xf32>
    %3 = tpu.matmul %0, %2, %cst {dimension_numbers = #tpu.dot_dimension_numbers<[1], [0], [0], [1], [0, 0, 1, 1], [], []>} : vector<8x8xf32>, vector<8x256xf32>, vector<8x256xf32> -> vector<8x256xf32>
    %c0_4 = arith.constant 0 : index
    %c0_5 = arith.constant 0 : index
    %4 = vector.load %arg5[%c0_4, %c0_5] : memref<8x1xf32, #tpu.memory_space<vmem>>, vector<8x1xf32>
    %5 = vector.broadcast %4 : vector<8x1xf32> to vector<8x256xf32>
    %6 = arith.addf %3, %5 : vector<8x256xf32>
    %c0_6 = arith.constant 0 : index
    %c0_7 = arith.constant 0 : index
    %c0_8 = arith.constant 0 : index
    %7 = vector.load %arg6[%c0_6, %c0_7, %c0_8] : memref<1x8x256xf32, #tpu.memory_space<vmem>>, vector<1x8x256xf32>
    %8 = vector.shape_cast %7 : vector<1x8x256xf32> to vector<8x256xf32>
    %9 = vector.shape_cast %6 : vector<8x256xf32> to vector<1x8x256xf32>
    tpu.vector_store %arg6[%c0_6, %c0_7, %c0_8], %9 {strides = array<i32>} : memref<1x8x256xf32, #tpu.memory_space<vmem>>, vector<1x8x256xf32>,
    return
  }
  func.func @transform_0(%arg0: i32, %arg1: i32, %arg2: i32) -> (i32, i32, i32) {
    %c0_i32 = arith.constant 0 : i32
    %c0_i32_0 = arith.constant 0 : i32
    return %arg0, %c0_i32, %arg2 : i32, i32, i32
  }
  func.func @transform_1(%arg0: i32, %arg1: i32, %arg2: i32) -> (i32, i32) {
    %c0_i32 = arith.constant 0 : i32
    %c0_i32_0 = arith.constant 0 : i32
    return %arg1, %c0_i32 : i32, i32
  }
  func.func @transform_2(%arg0: i32, %arg1: i32, %arg2: i32) -> (i32, i32) {
    %c0_i32 = arith.constant 0 : i32
    %c0_i32_0 = arith.constant 0 : i32
    return %arg1, %c0_i32 : i32, i32
  }
  func.func @transform_3(%arg0: i32, %arg1: i32, %arg2: i32) -> (i32, i32, i32) {
    %c0_i32 = arith.constant 0 : i32
    return %arg0, %arg1, %arg2 : i32, i32, i32
  }
}

</mosaic_0001>

<llo_original>
// kernel: tpu_custom_call.1
$region0: #{tpu_custom_call.1}
  #allocation0 [shape = 'u32[]', space=smem, size = 0x4, offset = 0x4, fixed_abs, tag = 'smem constant byte address 0x4 - core index']
  #allocation1 [shape = 'u32[144,128]{1,0:T(1,128)}', space=vmem, size = 0x12000, scoped, tag = 'internal scratch']
  %s0 = inlined_call_operand.hbm [shape: f32[2,8,256], index: 0, kind: input, shape index: {}]
  %s1 = inlined_call_operand.vmem [shape: f32[8,8], index: 1, kind: input, shape index: {}]
  %s2 = inlined_call_operand.vmem [shape: f32[8,1], index: 2, kind: input, shape index: {}]
  %s3 = inlined_call_operand.hbm [shape: f32[2,8,256], index: 3, kind: output, shape index: {}]
  %s4 = sld [smem:[#allocation0]]
  $region49: #{tpu_custom_call.1} parent=0
    _
  %s6 = ssub.s32 1, %s4
  %s7 = scalar_select 0, %s6, %s4
  $region1: #{tpu_custom_call.1} parent=0
    #allocation2 [shape = 'u8[16384]{0}', space=vmem, size = 0x4000, scoped, tag = 'input window, operand 0']
    #allocation3 [shape = 's32[2]{0}', space=sflag, size = 0x8, scoped, tag = 'scoped memory for tpu_custom_call.1']
    #allocation4 [shape = 's32[2]{0}', space=sflag, size = 0x8, scoped, tag = 'scoped memory for tpu_custom_call.1']
    #allocation5 [shape = 'u8[16384]{0}', space=vmem, size = 0x4000, scoped, tag = 'output window, operand 0']
    %8 = vsyncpa [#allocation3], 0
    %s9 = scalar_lea.sflag [#allocation3], 1
    %10 = vsyncpa %s9, 0
    %11 = vsyncpa [#allocation4], 0
    %s12 = scalar_lea.sflag [#allocation4], 1
    %13 = vsyncpa %s12, 0
    loop: start=0, step=1, limit=4
    $region2: #{tpu_custom_call.1} parent=1 // loop_pre_header
      _
    $region3: #{tpu_custom_call.1} parent=1 // loop_header
      %s15 = sphi 0, %s19
      %p16 = scmp.ge.s32.totalorder %s15, 4
      %s22 = sphi 0, %s41
      %s23 = sphi 0, %s37
      %s24 = sphi 0, %s33
      %s25 = sphi 0, %s22
      %s26 = sphi 0, %s23
      %s27 = sphi 0, %s24
      %s28 = sphi 0, %s25
      %s29 = sphi 0, %s26
      %s30 = sphi 0, %s27
      %s46 = sphi 0, %s48
      %s49 = sphi 0, %s46
      %s50 = sphi 0, %s49
      %s66 = sphi 0, %s50
      %s72 = sphi 0, %s74
      %s75 = sphi 0, %s72
      %s76 = sphi 0, %s75
      %s92 = sphi 0, %s76
      %s98 = sphi 0, %s100
      %s101 = sphi 0, %s98
      %s102 = sphi 0, %s101
      %s118 = sphi 0, %s102
      %s128 = sphi 0, %s130
      %s131 = sphi 0, %s128
      %s132 = sphi 0, %s131
      %s148 = sphi 0, %s132
    $region4: #{tpu_custom_call.1} parent=1 // loop_header_branch
      %18 = sbr.rel (%p16) target = $region8
    $region5: #{tpu_custom_call.1} parent=1 // loop_body
      %s20 = ssub.s32 %s15, 1
      %s21 = ssub.s32 %s15, 2
      %s31 = sadd.s32 1, %s24
      %p32 = scmp.ge.s32.totalorder %s31, 1
      %s33 = scalar_select %p32, 0, %s31
      %s34 = sadd.s32 1, %s23
      %s35 = scalar_select %p32, %s34, %s23
      %p36 = scmp.ge.s32.totalorder %s35, 1
      %s37 = scalar_select %p36, 0, %s35
      %s38 = sadd.s32 1, %s22
      %s39 = scalar_select %p36, %s38, %s22
      %p40 = scmp.ge.s32.totalorder %s39, 2
      %s41 = scalar_select %p40, 0, %s39
      %s42 = ssub.s32 %s22, %s41
      %s43 = ssub.s32 %s24, %s33
      %s44 = sor.u32 %s42, %s43
      %p45 = scmp.eq.s32.totalorder %s44, 0
      %s47 = sadd.s32 %s46, 1
      %s48 = scalar_select %p45, %s46, %s47
      %p51 = pneg %p45
      %p52 = scmp.eq.s32.totalorder %s15, 1
      %p53 = por %p51, %p52
      %p54 = scmp.ne.s32.totalorder %s46, %s49
      %p55 = scmp.eq.s32.totalorder %s15, 0
      %p56 = por %p54, %p55
      %p57 = scmp.ne.s32.totalorder %s46, %s49
      %p58 = scmp.eq.s32.totalorder %s20, 1
      %p59 = por %p57, %p58
      %p60 = scmp.ne.s32.totalorder %s49, %s50
      %p61 = scmp.eq.s32.totalorder %s20, 0
      %p62 = por %p60, %p61
      %p63 = scmp.ne.s32.totalorder %s49, %s50
      %p64 = scmp.eq.s32.totalorder %s21, 1
      %p65 = por %p63, %p64
      %p67 = scmp.ne.s32.totalorder %s50, %s66
      %p68 = scmp.eq.s32.totalorder %s21, 0
      %p69 = por %p67, %p68
      %s70 = ssub.s32 %s23, %s37
      %p71 = scmp.eq.s32.totalorder %s70, 0
      %s73 = sadd.s32 %s72, 1
      %s74 = scalar_select %p71, %s72, %s73
      %p77 = pneg %p71
      %p78 = scmp.eq.s32.totalorder %s15, 1
      %p79 = por %p77, %p78
      %p80 = scmp.ne.s32.totalorder %s72, %s75
      %p81 = scmp.eq.s32.totalorder %s15, 0
      %p82 = por %p80, %p81
      %p83 = scmp.ne.s32.totalorder %s72, %s75
      %p84 = scmp.eq.s32.totalorder %s20, 1
      %p85 = por %p83, %p84
      %p86 = scmp.ne.s32.totalorder %s75, %s76
      %p87 = scmp.eq.s32.totalorder %s20, 0
      %p88 = por %p86, %p87
      %p89 = scmp.ne.s32.totalorder %s75, %s76
      %p90 = scmp.eq.s32.totalorder %s21, 1
      %p91 = por %p89, %p90
      %p93 = scmp.ne.s32.totalorder %s76, %s92
      %p94 = scmp.eq.s32.totalorder %s21, 0
      %p95 = por %p93, %p94
      %s96 = ssub.s32 %s23, %s37
      %p97 = scmp.eq.s32.totalorder %s96, 0
      %s99 = sadd.s32 %s98, 1
      %s100 = scalar_select %p97, %s98, %s99
      %p103 = pneg %p97
      %p104 = scmp.eq.s32.totalorder %s15, 1
      %p105 = por %p103, %p104
      %p106 = scmp.ne.s32.totalorder %s98, %s101
      %p107 = scmp.eq.s32.totalorder %s15, 0
      %p108 = por %p106, %p107
      %p109 = scmp.ne.s32.totalorder %s98, %s101
      %p110 = scmp.eq.s32.totalorder %s20, 1
      %p111 = por %p109, %p110
      %p112 = scmp.ne.s32.totalorder %s101, %s102
      %p113 = scmp.eq.s32.totalorder %s20, 0
      %p114 = por %p112, %p113
      %p115 = scmp.ne.s32.totalorder %s101, %s102
      %p116 = scmp.eq.s32.totalorder %s21, 1
      %p117 = por %p115, %p116
      %p119 = scmp.ne.s32.totalorder %s102, %s118
      %p120 = scmp.eq.s32.totalorder %s21, 0
      %p121 = por %p119, %p120
      %s122 = ssub.s32 %s22, %s41
      %s123 = ssub.s32 %s23, %s37
      %s124 = sor.u32 %s122, %s123
      %s125 = ssub.s32 %s24, %s33
      %s126 = sor.u32 %s124, %s125
      %p127 = scmp.eq.s32.totalorder %s126, 0
      %s129 = sadd.s32 %s128, 1
      %s130 = scalar_select %p127, %s128, %s129
      %p133 = pneg %p127
      %p134 = scmp.eq.s32.totalorder %s15, 1
      %p135 = por %p133, %p134
      %p136 = scmp.ne.s32.totalorder %s128, %s131
      %p137 = scmp.eq.s32.totalorder %s15, 0
      %p138 = por %p136, %p137
      %p139 = scmp.ne.s32.totalorder %s128, %s131
      %p140 = scmp.eq.s32.totalorder %s20, 1
      %p141 = por %p139, %p140
      %p142 = scmp.ne.s32.totalorder %s131, %s132
      %p143 = scmp.eq.s32.totalorder %s20, 0
      %p144 = por %p142, %p143
      %p145 = scmp.ne.s32.totalorder %s131, %s132
      %p146 = scmp.eq.s32.totalorder %s21, 1
      %p147 = por %p145, %p146
      %p149 = scmp.ne.s32.totalorder %s132, %s148
      %p150 = scmp.eq.s32.totalorder %s21, 0
      %p151 = por %p149, %p150
      %p152 = scmp.le.s32.totalorder 1, %s15
      %p153 = scmp.lt.s32.totalorder %s15, 3
      %p154 = pnand %p152, %p153
      %p155 = pneg %p154
      // Predicated region
      $region9: #{tpu_custom_call.1} parent=5 // pred_check
        _
      $region10: #{tpu_custom_call.1} parent=5 // pred_check_branch
        %157 = sbr.rel (%p154) target = $region12
      $region11: #{tpu_custom_call.1} parent=5 // pred_region
        %s158 = ssub.s32 %s15, 1
        // Predicated region
        $region13: #{tpu_custom_call.1} parent=11 // pred_check
          %p159 = pneg %p88
        $region14: #{tpu_custom_call.1} parent=11 // pred_check_branch
          %161 = sbr.rel (%p159) target = $region16
        $region15: #{tpu_custom_call.1} parent=11 // pred_region
          %p162 = scmp.lt.s32.totalorder %s26, 0
          %s163 = scalar_select %p162, %s26, 0
          %s164 = smul.addr %s163, 8
          %s165 = scalar_lea.vmem %s1, %s164
        $region16: #{tpu_custom_call.1} parent=11 // pred_fallthru
          _
        // Predicated region
        $region17: #{tpu_custom_call.1} parent=11 // pred_check
          %p166 = pneg %p114
        $region18: #{tpu_custom_call.1} parent=11 // pred_check_branch
          %168 = sbr.rel (%p166) target = $region20
        $region19: #{tpu_custom_call.1} parent=11 // pred_region
          %p169 = scmp.lt.s32.totalorder %s26, 0
          %s170 = scalar_select %p169, %s26, 0
          %s171 = smul.addr %s170, 8
          %s172 = scalar_lea.vmem %s2, %s171
        $region20: #{tpu_custom_call.1} parent=11 // pred_fallthru
          _
      $region12: #{tpu_custom_call.1} parent=5 // pred_fallthru
        _
      %p173 = scmp.lt.s32.totalorder %s15, 2
      // Predicated region
      $region21: #{tpu_custom_call.1} parent=5 // pred_check
        %p174 = pneg %p173
      $region22: #{tpu_custom_call.1} parent=5 // pred_check_branch
        %176 = sbr.rel (%p174) target = $region24
      $region23: #{tpu_custom_call.1} parent=5 // pred_region
        // Predicated region
        $region25: #{tpu_custom_call.1} parent=23 // pred_check
          %p177 = pneg %p56
        $region26: #{tpu_custom_call.1} parent=23 // pred_check_branch
          %179 = sbr.rel (%p177) target = $region28
        $region27: #{tpu_custom_call.1} parent=23 // pred_region
          %s180 = sand.u32 %s46, 1
          %s181 = scalar_lea.sflag [#allocation3], %s180
          %s182 = sand.u32 %s46, 1
          %s183 = smul.addr %s182, 16
          %s184 = scalar_lea.vmem [#allocation2], %s183
          %s185 = smul.u32 2, %s24
          %s187 = ssub.s32 256, 256
          %188 = vsyncadd %s181, %s187
          %s189 = smul.addr %s22, 2
          %s190 = sadd.s32 %s185, %s189
          %s191 = smul.addr %s190, 128
          %s192 = scalar_lea.hbm %s0, %s191
          %s194 = sshll.u32 %s184, 4
          %s195 = int_to_ptr.vmem [resolvable:$true] %s194
          %197 = dma.hbm_to_vmem [thread:$0]  %s192, 256, %s195, %s181
        $region28: #{tpu_custom_call.1} parent=23 // pred_fallthru
          _
      $region24: #{tpu_custom_call.1} parent=5 // pred_fallthru
        _
      %p198 = scmp.le.s32.totalorder 1, %s15
      %p199 = scmp.lt.s32.totalorder %s15, 3
      %p200 = pnand %p198, %p199
      %p201 = pneg %p200
      // Predicated region
      $region29: #{tpu_custom_call.1} parent=5 // pred_check
        _
      $region30: #{tpu_custom_call.1} parent=5 // pred_check_branch
        %203 = sbr.rel (%p200) target = $region32
      $region31: #{tpu_custom_call.1} parent=5 // pred_region
        %s204 = ssub.s32 %s15, 1
        %s205 = sand.u32 %s49, 1
        %s206 = scalar_lea.sflag [#allocation3], %s205
        %s207 = sand.u32 %s49, 1
        %s208 = smul.addr %s207, 16
        %s209 = scalar_lea.vmem [#allocation2], %s208
        // Predicated region
        $region33: #{tpu_custom_call.1} parent=31 // pred_check
          %p210 = pneg %p62
        $region34: #{tpu_custom_call.1} parent=31 // pred_check_branch
          %212 = sbr.rel (%p210) target = $region36
        $region35: #{tpu_custom_call.1} parent=31 // pred_region
          %213 = dma.done %s206, 256
        $region36: #{tpu_custom_call.1} parent=31 // pred_fallthru
          _
        %s214 = sand.u32 %s49, 1
        %s215 = scalar_lea.sflag [#allocation3], %s214
        %s216 = sand.u32 %s49, 1
        %s217 = smul.addr %s216, 16
        %s218 = scalar_lea.vmem [#allocation2], %s217
        %p219 = pneg %p62
        %p220 = pneg %p59
        %p221 = scmp.lt.s32.totalorder %s26, 0
        %s222 = scalar_select %p221, %s26, 0
        %s223 = smul.addr %s222, 8
        %s224 = scalar_lea.vmem %s1, %s223
        %p225 = pneg %p88
        %p226 = pneg %p85
        %p227 = scmp.lt.s32.totalorder %s26, 0
        %s228 = scalar_select %p227, %s26, 0
        %s229 = smul.addr %s228, 8
        %s230 = scalar_lea.vmem %s2, %s229
        %p231 = pneg %p114
        %p232 = pneg %p111
        %p233 = pneg %p144
        %p234 = pneg %p141
        %s235 = sand.u32 %s131, 1
        %s236 = scalar_lea.sflag [#allocation4], %s235
        %s237 = sand.u32 %s131, 1
        %s238 = smul.addr %s237, 16
        %s239 = scalar_lea.vmem [#allocation5], %s238
        %s240 = smul.u32 2, %s27
        %p241 = scmp.lt.s32.totalorder %s26, 0
        %s242 = scalar_select %p241, %s26, 0
        %s243 = smul.addr %s242, 8
        %s244 = scalar_lea.vmem %s1, %s243
        %p245 = scmp.lt.s32.totalorder %s26, 0
        %s246 = scalar_select %p245, %s26, 0
        %s247 = smul.addr %s246, 8
        %s248 = scalar_lea.vmem %s2, %s247
        %s249 = smul.u32 2, %s27
        %v250 = vld [vmem:[%s244] sm:$0xff]
        %v251 = vld [vmem:[%s209] sm:$0xff]
        %v252 = vld [vmem:[%s209 + $0x8] sm:$0xff]
        %v253 = vld [vmem:[%s248] sm:$0xff]
        %255 = vset.pattern.permute.xlu0 0
        %256 = vperm.xlu0 %255, %v253
        %v257 = vpop.permute.xlu0 %256
        %vm259 = vcmask 64512
        %v261 = vsel %vm259, %v250, 0
        %263 = vmatprep.subr.mxu0 %v252
        %264 = vmatpush1.msra.mxu0 %v251
        %265 = vmatprep.subr.mxu0 0.0
        %266 = vmatpush1.msra.mxu0 0.0
        %267 = vmatprep.subr.mxu0 0.0
        %268 = vmatpush1.msra.mxu0 0.0
        %269 = vmatprep.subr.mxu0 0.0
        %270 = vmatpush1.msra.mxu0 0.0
        %271 = vmatprep.subr.mxu0 0.0
        %272 = vmatpush1.msra.mxu0 0.0
        %273 = vmatprep.subr.mxu0 0.0
        %274 = vmatpush1.msra.mxu0 0.0
        %275 = vmatprep.subr.mxu0 0.0
        %276 = vmatpush1.msra.mxu0 0.0
        %277 = vmatprep.subr.mxu0 0.0
        %278 = vmatpush1.msra.mxu0 0.0
        %279 = vmatprep.subr.mxu0 0.0
        %280 = vmatpush1.msra.mxu0 0.0
        %281 = vmatprep.subr.mxu0 0.0
        %282 = vmatpush1.msra.mxu0 0.0
        %283 = vmatprep.subr.mxu0 0.0
        %284 = vmatpush1.msra.mxu0 0.0
        %285 = vmatprep.subr.mxu0 0.0
        %286 = vmatpush1.msra.mxu0 0.0
        %287 = vmatprep.subr.mxu0 0.0
        %288 = vmatpush1.msra.mxu0 0.0
        %289 = vmatprep.subr.mxu0 0.0
        %290 = vmatpush1.msra.mxu0 0.0
        %291 = vmatprep.subr.mxu0 0.0
        %292 = vmatpush1.msra.mxu0 0.0
        %293 = vmatprep.subr.mxu0 0.0
        %294 = vmatpush1.msra.mxu0 0.0
        %295 = vmatprep.subr.mxu0 0.0
        %296 = vmatpush1.msra.mxu0 0.0
        %297 = vmatprep.subr.mxu0 0.0
        %298 = vmatpush1.msra.mxu0 0.0
        %299 = vmatprep.subr.mxu0 0.0
        %300 = vmatpush1.msra.mxu0 0.0
        %301 = vmatprep.subr.mxu0 0.0
        %302 = vmatpush1.msra.mxu0 0.0
        %303 = vmatprep.subr.mxu0 0.0
        %304 = vmatpush1.msra.mxu0 0.0
        %305 = vmatprep.subr.mxu0 0.0
        %306 = vmatpush1.msra.mxu0 0.0
        %307 = vmatprep.subr.mxu0 0.0
        %308 = vmatpush1.msra.mxu0 0.0
        %309 = vmatprep.subr.mxu0 0.0
        %310 = vmatpush1.msra.mxu0 0.0
        %311 = vmatprep.subr.mxu0 0.0
        %312 = vmatpush1.msra.mxu0 0.0
        %313 = vmatprep.subr.mxu0 0.0
        %314 = vmatpush1.msra.mxu0 0.0
        %315 = vmatprep.subr.mxu0 0.0
        %316 = vmatpush1.msra.mxu0 0.0
        %317 = vmatprep.subr.mxu0 0.0
        %318 = vmatpush1.msra.mxu0 0.0
        %319 = vmatprep.subr.mxu0 0.0
        %320 = vmatpush1.msra.mxu0 0.0
        %321 = vmatprep.subr.mxu0 0.0
        %322 = vmatpush1.msra.mxu0 0.0
        %323 = vmatprep.subr.mxu0 0.0
        %324 = vmatpush1.msra.mxu0 0.0
        %325 = vmatprep.subr.mxu0 0.0
        %326 = vmatpush1.msra.mxu0 0.0
        %327 = vmatprep.mubr.f32.mxu0 0.0
        %328 = vmatmul.mubr.f32.gmra.mrb[0].mxu0 %v261
        %v329 = vpop.f32.mrb[0].mxu0
        %v330 = vadd.f32 %v257, %v329
        %v331 = vpop.f32.mrb[0].mxu0
        %v332 = vadd.f32 %v257, %v331
        %333 = vdwg.mxu0
        %334 = vst [vmem:[%s239] sm:$0xff] %v330
        %335 = vst [vmem:[%s239 + $0x8] sm:$0xff] %v332
        %s336 = sand.u32 %s131, 1
        %s337 = scalar_lea.sflag [#allocation4], %s336
        %s338 = sand.u32 %s131, 1
        %s339 = smul.addr %s338, 16
        %s340 = scalar_lea.vmem [#allocation5], %s339
        // Predicated region
        $region37: #{tpu_custom_call.1} parent=31 // pred_check
          %p341 = pneg %p141
        $region38: #{tpu_custom_call.1} parent=31 // pred_check_branch
          %343 = sbr.rel (%p341) target = $region40
        $region39: #{tpu_custom_call.1} parent=31 // pred_region
          %s344 = smul.u32 2, %s27
          %s346 = ssub.s32 256, 256
          %347 = vsyncadd %s337, %s346
          %s348 = smul.addr %s26, 2
          %s349 = sadd.s32 %s344, %s348
          %s350 = smul.addr %s25, 2
          %s351 = sadd.s32 %s349, %s350
          %s352 = smul.addr %s351, 128
          %s353 = scalar_lea.hbm %s3, %s352
          %s355 = sshll.u32 %s340, 4
          %s356 = int_to_ptr.vmem [resolvable:$true] %s355
          %358 = dma.vmem_to_hbm [thread:$0]  %s356, 256, %s353, %s337
        $region40: #{tpu_custom_call.1} parent=31 // pred_fallthru
          _
      $region32: #{tpu_custom_call.1} parent=5 // pred_fallthru
        _
      %p359 = scmp.le.s32.totalorder 2, %s15
      // Predicated region
      $region41: #{tpu_custom_call.1} parent=5 // pred_check
        %p360 = pneg %p359
      $region42: #{tpu_custom_call.1} parent=5 // pred_check_branch
        %362 = sbr.rel (%p360) target = $region44
      $region43: #{tpu_custom_call.1} parent=5 // pred_region
        %s363 = ssub.s32 %s15, 2
        // Predicated region
        $region45: #{tpu_custom_call.1} parent=43 // pred_check
          %p364 = pneg %p147
        $region46: #{tpu_custom_call.1} parent=43 // pred_check_branch
          %366 = sbr.rel (%p364) target = $region48
        $region47: #{tpu_custom_call.1} parent=43 // pred_region
          %s367 = sand.u32 %s132, 1
          %s368 = scalar_lea.sflag [#allocation4], %s367
          %s369 = sand.u32 %s132, 1
          %s370 = smul.addr %s369, 16
          %s371 = scalar_lea.vmem [#allocation5], %s370
          %372 = dma.done %s368, 256
        $region48: #{tpu_custom_call.1} parent=43 // pred_fallthru
          _
      $region44: #{tpu_custom_call.1} parent=5 // pred_fallthru
        _
    $region6: #{tpu_custom_call.1} parent=1 // loop_footer
      %s19 = sadd.s32 1, %s15
    $region7: #{tpu_custom_call.1} parent=1 // loop_footer_branch
      %14 = sbr.rel target = $region3
    $region8: #{tpu_custom_call.1} parent=1 // loop_exit
      _
    %373 = vsyncpa [#allocation3], 1
    %s374 = scalar_lea.sflag [#allocation3], 1
    %375 = vsyncpa %s374, 1
    %376 = vsyncpa [#allocation4], 1
    %s377 = scalar_lea.sflag [#allocation4], 1
    %378 = vsyncpa %s377, 1

</llo_original>
